<compile_context>
chip_gen: v6e
topology: v6e:2x2x1
jax: 0.10.0
libtpu: 0.0.40
codegen_flags: <defaults>
</compile_context>

<pallas_src>
import jax
import jax.numpy as jnp
from jax.experimental import pallas as pl
from jax.experimental.pallas import tpu as pltpu

W_CRIT = 500.0
W_TASK = 1.0
LANES = 128
BLOCK_R = 512                    # (512, 128) f32 tile = 256 KiB / stream / step
TILE_ELEMS = BLOCK_R * LANES     # elements per grid step per stream
SMALL_MAX = 32 * 1024            # direct (no-grid) path up to this many elements


def _make_small_kernel(inv_b):
    """No-grid kernel for small B: four (1, B) VMEM operands, scalar SMEM out."""
    w_task_n = W_TASK * inv_b
    w_crit_n = W_CRIT * inv_b

    def kernel(out_ref, tgt_ref, crit_ref, tcrit_ref, o_ref):
        d_task = out_ref[...] - tgt_ref[...]
        d_crit = crit_ref[...] - tcrit_ref[...]
        # Two partial sums, two scalar weights applied once (no per-element
        # iota/where weighting).
        o_ref[0, 0] = (w_task_n * jnp.sum(d_task * d_task)
                       + w_crit_n * jnp.sum(d_crit * d_crit))

    return kernel


def _make_grid_kernel(inv_b):
    """Gridded reduction kernel for large B: (BLOCK_R, 128) tiles per stream."""
    w_task_n = W_TASK * inv_b
    w_crit_n = W_CRIT * inv_b

    def kernel(out_ref, tgt_ref, crit_ref, tcrit_ref, o_ref, acc_ref):
        i = pl.program_id(0)

        @pl.when(i == 0)
        def _():
            acc_ref[0] = jnp.float32(0.0)
            acc_ref[1] = jnp.float32(0.0)

        d_task = out_ref[...] - tgt_ref[...]
        d_crit = crit_ref[...] - tcrit_ref[...]
        acc_ref[0] += jnp.sum(d_task * d_task)
        acc_ref[1] += jnp.sum(d_crit * d_crit)

        @pl.when(i == pl.num_programs(0) - 1)
        def _():
            o_ref[0, 0] = w_task_n * acc_ref[0] + w_crit_n * acc_ref[1]

    return kernel


def custom_loss_task_criticality(outputs, targets, criticality, target_criticality):
    """Pallas equivalent of CustomLoss_task_criticality.forward (scalar f32)."""
    outputs = jnp.squeeze(outputs).astype(jnp.float32).reshape(-1)
    targets = targets.astype(jnp.float32).reshape(-1)
    criticality = criticality.astype(jnp.float32).reshape(-1)
    target_criticality = target_criticality.astype(jnp.float32).reshape(-1)

    B = targets.shape[0]
    assert B > 0, "batch size must be > 0"
    inv_b = 1.0 / B

    if B <= SMALL_MAX:
        # (B,) -> (1, B) is a free metadata reshape: no stack/pad fusion, no
        # extra HBM round trip.  Four tiny DMAs + one scalar writeback.
        args = [v.reshape(1, B)
                for v in (outputs, targets, criticality, target_criticality)]
        vmem = pl.BlockSpec(memory_space=pltpu.MemorySpace.VMEM)
        out = pl.pallas_call(
            _make_small_kernel(inv_b),
            out_shape=jax.ShapeDtypeStruct((1, 1), jnp.float32),
            in_specs=[vmem, vmem, vmem, vmem],
            out_specs=pl.BlockSpec(memory_space=pltpu.MemorySpace.SMEM),
        )(*args)
        return out[0, 0]

    # ---- Large-B path: sublane-dense (R, 128) layout, gridded reduction ----
    P = pl.cdiv(B, TILE_ELEMS) * TILE_ELEMS

    def prep(v):
        if P != B:
            # Zero pad: both streams of a pair are padded identically, so the
            # padded tail contributes exactly 0 to each squared-diff sum.
            v = jnp.pad(v, (0, P - B))
        return v.reshape(P // LANES, LANES)

    args = [prep(v) for v in (outputs, targets, criticality, target_criticality)]
    grid = (P // TILE_ELEMS,)
    blk = pl.BlockSpec((BLOCK_R, LANES), lambda i: (i, 0))

    out = pl.pallas_call(
        _make_grid_kernel(inv_b),
        out_shape=jax.ShapeDtypeStruct((1, 1), jnp.float32),
        grid_spec=pltpu.PrefetchScalarGridSpec(
            num_scalar_prefetch=0,
            grid=grid,
            in_specs=[blk, blk, blk, blk],
            out_specs=pl.BlockSpec(memory_space=pltpu.MemorySpace.SMEM),
            scratch_shapes=[pltpu.SMEM((2,), jnp.float32)],
        ),
        compiler_params=pltpu.CompilerParams(
            dimension_semantics=("arbitrary",)),
    )(*args)
    return out[0, 0]
    # TODO(synk): on v7x a leading size-2 "parallel" grid axis (one partial sum
    # per TensorCore, summed in the wrapper) would let both cores drive HBM.


if __name__ == "__main__":
    # Small-B path (mirrors the module at a small batch).
    batch_size = 8
    target_branching = 1.0
    target_criticality = jnp.full((batch_size,), target_branching, jnp.float32)

    key = jax.random.PRNGKey(0)
    k1, k2, k3 = jax.random.split(key, 3)
    outputs = jax.random.normal(k1, (batch_size, 1), jnp.float32)   # squeezed inside
    targets = jax.random.normal(k2, (batch_size,), jnp.float32)
    criticality = 1.0 + 0.1 * jax.random.normal(k3, (batch_size,), jnp.float32)

    total = jax.block_until_ready(
        custom_loss_task_criticality(outputs, targets, criticality,
                                     target_criticality))

    task_ref = jnp.mean((jnp.squeeze(outputs) - targets) ** 2)
    crit_ref = jnp.mean((criticality - target_criticality) ** 2)
    ref = W_TASK * task_ref + W_CRIT * crit_ref
    assert jnp.allclose(total, ref, rtol=1e-5, atol=1e-5), (total, ref)

    # Gridded large-B path (ragged B so the zero-pad tail + multi-step
    # accumulate/finalize are exercised).
    B_big = 2 * TILE_ELEMS + 100
    kb0, kb1, kb2 = jax.random.split(jax.random.PRNGKey(1), 3)
    outputs_b = jax.random.normal(kb0, (B_big,), jnp.float32)
    targets_b = jax.random.normal(kb1, (B_big,), jnp.float32)
    criticality_b = 1.0 + 0.1 * jax.random.normal(kb2, (B_big,), jnp.float32)
    tcrit_b = jnp.full((B_big,), target_branching, jnp.float32)

    total_b = jax.block_until_ready(
        custom_loss_task_criticality(outputs_b, targets_b, criticality_b, tcrit_b))
    ref_b = (W_TASK * jnp.mean((outputs_b - targets_b) ** 2)
             + W_CRIT * jnp.mean((criticality_b - tcrit_b) ** 2))
    assert jnp.allclose(total_b, ref_b, rtol=1e-4, atol=1e-4), (total_b, ref_b)

    print("KERNEL_OK")
</pallas_src>

<mosaic_0001>
module attributes {stable_mosaic.version = 11 : i64} {
  func.func @kernel(%arg0: memref<1x8xf32, #tpu.memory_space<vmem>>, %arg1: memref<1x8xf32, #tpu.memory_space<vmem>>, %arg2: memref<1x8xf32, #tpu.memory_space<vmem>>, %arg3: memref<1x8xf32, #tpu.memory_space<vmem>>, %arg4: memref<1x1xf32, #tpu.memory_space<smem>>) attributes {dimension_semantics = [], scalar_prefetch = 0 : i64, scratch_operands = 0 : i64, tpu.core_type = #tpu.core_type<tc>} {
    %c0 = arith.constant 0 : index
    %c0_0 = arith.constant 0 : index
    %0 = vector.load %arg0[%c0, %c0_0] : memref<1x8xf32, #tpu.memory_space<vmem>>, vector<1x8xf32>
    %c0_1 = arith.constant 0 : index
    %c0_2 = arith.constant 0 : index
    %1 = vector.load %arg1[%c0_1, %c0_2] : memref<1x8xf32, #tpu.memory_space<vmem>>, vector<1x8xf32>
    %2 = arith.subf %0, %1 : vector<1x8xf32>
    %c0_3 = arith.constant 0 : index
    %c0_4 = arith.constant 0 : index
    %3 = vector.load %arg2[%c0_3, %c0_4] : memref<1x8xf32, #tpu.memory_space<vmem>>, vector<1x8xf32>
    %c0_5 = arith.constant 0 : index
    %c0_6 = arith.constant 0 : index
    %4 = vector.load %arg3[%c0_5, %c0_6] : memref<1x8xf32, #tpu.memory_space<vmem>>, vector<1x8xf32>
    %5 = arith.subf %3, %4 : vector<1x8xf32>
    %6 = arith.mulf %2, %2 : vector<1x8xf32>
    %7 = vector.shape_cast %6 : vector<1x8xf32> to vector<1x1x8xf32>
    %cst = arith.constant dense<0.000000e+00> : vector<1xf32>
    %8 = vector.multi_reduction <add>, %7, %cst [1, 2] : vector<1x1x8xf32> to vector<1xf32>
    %9 = vector.shape_cast %8 : vector<1xf32> to vector<1x1x1xf32>
    %10 = vector.extract %9[0, 0, 0] : f32 from vector<1x1x1xf32>
    %cst_7 = arith.constant 1.250000e-01 : f32
    %11 = arith.mulf %cst_7, %10 : f32
    %12 = arith.mulf %5, %5 : vector<1x8xf32>
    %13 = vector.shape_cast %12 : vector<1x8xf32> to vector<1x1x8xf32>
    %cst_8 = arith.constant dense<0.000000e+00> : vector<1xf32>
    %14 = vector.multi_reduction <add>, %13, %cst_8 [1, 2] : vector<1x1x8xf32> to vector<1xf32>
    %15 = vector.shape_cast %14 : vector<1xf32> to vector<1x1x1xf32>
    %16 = vector.extract %15[0, 0, 0] : f32 from vector<1x1x1xf32>
    %cst_9 = arith.constant 6.250000e+01 : f32
    %17 = arith.mulf %cst_9, %16 : f32
    %18 = arith.addf %11, %17 : f32
    %c0_10 = arith.constant 0 : index
    %c0_11 = arith.constant 0 : index
    %19 = memref.load %arg4[%c0_10, %c0_11] : memref<1x1xf32, #tpu.memory_space<smem>>
    memref.store %18, %arg4[%c0_10, %c0_11] : memref<1x1xf32, #tpu.memory_space<smem>>
    return
  }
}

</mosaic_0001>

<llo_original>
// kernel: tpu_custom_call.1
$region0: #{tpu_custom_call.1}
  #allocation0 [shape = 'u32[]', space=smem, size = 0x4, offset = 0x4, fixed_abs, tag = 'smem constant byte address 0x4 - core index']
  #allocation1 [shape = 'u32[144,128]{1,0:T(1,128)}', space=vmem, size = 0x12000, scoped, tag = 'internal scratch']
  %s0 = inlined_call_operand.hbm [shape: f32[1,8], index: 0, kind: input, shape index: {}]
  %s1 = inlined_call_operand.vmem [shape: f32[1,8], index: 1, kind: input, shape index: {}]
  %s2 = inlined_call_operand.vmem [shape: f32[1,8], index: 2, kind: input, shape index: {}]
  %s3 = inlined_call_operand.vmem [shape: f32[1,8], index: 3, kind: input, shape index: {}]
  %s4 = inlined_call_operand.hbm [shape: f32[1,1], index: 4, kind: output, shape index: {}]
  %s5 = sld [smem:[#allocation0]]
  $region30: #{tpu_custom_call.1} parent=0
    _
  %s7 = ssub.s32 1, %s5
  %s8 = scalar_select 0, %s7, %s5
  $region1: #{tpu_custom_call.1} parent=0
    #allocation2 [shape = 'u8[512]{0}', space=vmem, size = 0x400, scoped, tag = 'input window, operand 0, single buffered']
    #allocation3 [shape = 's32[1]{0}', space=sflag, size = 0x4, scoped, tag = 'scoped memory for tpu_custom_call.1']
    #allocation4 [shape = 's32[1]{0}', space=sflag, size = 0x4, scoped, tag = 'scoped memory for tpu_custom_call.1']
    #allocation5 [shape = 'u8[512]{0}', space=smem, size = 0x200, scoped, tag = 'output window, operand 0, single buffered']
    %9 = vsyncpa [#allocation3], 0
    %10 = vsyncpa [#allocation4], 0
    // Predicated region
    $region2: #{tpu_custom_call.1} parent=1 // pred_check
      _
    $region3: #{tpu_custom_call.1} parent=1 // pred_check_branch
      %12 = sbr.rel (0) target = $region5
    $region4: #{tpu_custom_call.1} parent=1 // pred_region
      %s14 = ssub.s32 16, 16
      %15 = vsyncadd [#allocation3], %s14
      %s17 = sshll.u32 [#allocation2], 4
      %s18 = int_to_ptr.vmem [resolvable:$true] %s17
      %20 = dma.hbm_to_vmem [thread:$0]  %s0, 16, %s18, [#allocation3]
    $region5: #{tpu_custom_call.1} parent=1 // pred_fallthru
      _
    // Predicated region
    $region6: #{tpu_custom_call.1} parent=1 // pred_check
      _
    $region7: #{tpu_custom_call.1} parent=1 // pred_check_branch
      %22 = sbr.rel (0) target = $region9
    $region8: #{tpu_custom_call.1} parent=1 // pred_region
      _
    $region9: #{tpu_custom_call.1} parent=1 // pred_fallthru
      _
    // Predicated region
    $region10: #{tpu_custom_call.1} parent=1 // pred_check
      _
    $region11: #{tpu_custom_call.1} parent=1 // pred_check_branch
      %24 = sbr.rel (0) target = $region13
    $region12: #{tpu_custom_call.1} parent=1 // pred_region
      _
    $region13: #{tpu_custom_call.1} parent=1 // pred_fallthru
      _
    // Predicated region
    $region14: #{tpu_custom_call.1} parent=1 // pred_check
      _
    $region15: #{tpu_custom_call.1} parent=1 // pred_check_branch
      %26 = sbr.rel (0) target = $region17
    $region16: #{tpu_custom_call.1} parent=1 // pred_region
      _
    $region17: #{tpu_custom_call.1} parent=1 // pred_fallthru
      _
    // Predicated region
    $region18: #{tpu_custom_call.1} parent=1 // pred_check
      _
    $region19: #{tpu_custom_call.1} parent=1 // pred_check_branch
      %28 = sbr.rel (0) target = $region21
    $region20: #{tpu_custom_call.1} parent=1 // pred_region
      %29 = dma.done [#allocation3], 16
    $region21: #{tpu_custom_call.1} parent=1 // pred_fallthru
      _
    %v30 = vld [vmem:[#allocation2] sm:$0x1]
    %v31 = vld [vmem:[%s1] sm:$0x1]
    %v32 = vsub.f32 %v30, %v31
    %v33 = vld [vmem:[%s2] sm:$0x1]
    %v34 = vld [vmem:[%s3] sm:$0x1]
    %v35 = vsub.f32 %v33, %v34
    %v36 = vmul.f32 %v32, %v32
    %vm37 = vcmask 57344
    %v38 = vsel %vm37, %v36, 0.0
    %39 = vadd.xlane.f32.xlu0 %v38
    %v40 = vpop.xlane.xlu0 %39
    %v41 = vrot.slane %v40, 4
    %v42 = vadd.f32 %v40, %v41
    %v43 = vrot.slane %v42, 2
    %v44 = vadd.f32 %v42, %v43
    %v45 = vrot.slane %v44, 1
    %v46 = vadd.f32 %v44, %v45
    %s47 = vtos %v46
    %s48 = smul.f32 %s47, 0.125
    %v49 = vmul.f32 %v35, %v35
    %v50 = vsel %vm37, %v49, 0.0
    %51 = vadd.xlane.f32.xlu0 %v50
    %v52 = vpop.xlane.xlu0 %51
    %v53 = vrot.slane %v52, 4
    %v54 = vadd.f32 %v52, %v53
    %v55 = vrot.slane %v54, 2
    %v56 = vadd.f32 %v54, %v55
    %v57 = vrot.slane %v56, 1
    %v58 = vadd.f32 %v56, %v57
    %s59 = vtos %v58
    %s60 = smul.f32 %s59, 62.5
    %s61 = sadd.f32 %s48, %s60
    %s62 = scalar_lea.smem [#allocation5], 0
    %63 = sst [smem:[%s62]] %s61
    // Predicated region
    $region22: #{tpu_custom_call.1} parent=1 // pred_check
      _
    $region23: #{tpu_custom_call.1} parent=1 // pred_check_branch
      %65 = sbr.rel (0) target = $region25
    $region24: #{tpu_custom_call.1} parent=1 // pred_region
      %s67 = ssub.s32 16, 16
      %68 = vsyncadd [#allocation4], %s67
      %71 = dma.smem_to_hbm [#allocation5], 16, %s4, [#allocation4]
    $region25: #{tpu_custom_call.1} parent=1 // pred_fallthru
      _
    // Predicated region
    $region26: #{tpu_custom_call.1} parent=1 // pred_check
      _
    $region27: #{tpu_custom_call.1} parent=1 // pred_check_branch
      %73 = sbr.rel (0) target = $region29
    $region28: #{tpu_custom_call.1} parent=1 // pred_region
      %74 = dma.done [#allocation4], 16
    $region29: #{tpu_custom_call.1} parent=1 // pred_fallthru
      _
    %75 = sfence
    %76 = vsyncpa [#allocation3], 1
    %77 = vsyncpa [#allocation4], 1

</llo_original>
